<compile_context>
chip_gen: v7x
topology: tpu7x:2x2x1
jax: 0.10.0
libtpu: 0.0.40
codegen_flags: <defaults>
</compile_context>

<pallas_src>
import functools
import math

import jax
import jax.numpy as jnp
from jax.experimental import pallas as pl
from jax.experimental.pallas import tpu as pltpu

_LANES = 128
_SUBLANES = 8
_HALF_LOG_2PI = 0.5 * math.log(2.0 * math.pi)


def _nll_kernel(mu_ref, sigma_ref, y_ref, out_ref, *,
                tiles_per_slice, tile_rows, valid_rows, need_mask, approx):
    """Accumulate per-tile Gaussian NLL sums (constant term hoisted out)."""
    i = pl.program_id(1)  # inner ("arbitrary") reduction axis

    @pl.when(i == 0)
    def _():
        out_ref[...] = jnp.zeros_like(out_ref)

    mu = mu_ref[...].astype(jnp.float32)
    sigma = sigma_ref[...].astype(jnp.float32)
    y = y_ref[...].astype(jnp.float32)

    # Cheap insurance against sigma <= 0.  NOTE: deviates from PyTorch's
    # Normal(validate_args=True), which would raise; invalid inputs are
    # clamped instead of producing inf/nan.
    sigma = jnp.maximum(sigma, jnp.float32(1e-12))

    # -log N(y | mu, sigma) = log(sigma) + 0.5*((y-mu)/sigma)^2  [+ 0.5*log(2pi)]
    if approx:
        inv_sigma = pl.reciprocal(sigma, approx=True)   # single EUP push
        z = (y - mu) * inv_sigma
    else:
        z = (y - mu) / sigma
    nll = jnp.log(sigma) + 0.5 * (z * z)

    if need_mask:
        # Zero rows past the end of the data.  Covers both (a) the ragged
        # last tile (rows beyond `valid_rows` are undefined data from the
        # partial-block DMA) and (b) duplicate grid points whose index_map
        # was clamped to the last block when total_tiles does not split
        # evenly across the slice axis.
        t = pl.program_id(0) * tiles_per_slice + i
        row0 = t * tile_rows
        local_row = jax.lax.broadcasted_iota(jnp.int32, (tile_rows, _LANES), 0)
        nll = jnp.where(row0 + local_row < valid_rows, nll, 0.0)

    # Reduce the (tile_rows, 128) tile to an (8, 128) partial: sublane-group
    # adds only (pure VPU), no per-iteration cross-lane reduce or scalar RMW.
    partial = nll.reshape(-1, _SUBLANES, _LANES).sum(axis=0)
    out_ref[0] += partial


def _device_defaults():
    """(tile_rows, num_slices) tuned per TPU generation."""
    kind = ""
    try:
        kind = jax.devices()[0].device_kind.lower()
    except Exception:  # pragma: no cover - be robust to exotic backends
        pass
    if "v7" in kind:
        # 2 MiB blocks; 3 inputs x 2 buffers = 12 MiB (< 32 MiB scoped default);
        # 2 slices so both TensorCores split the parallel axis.
        return 4096, 2
    if "v6" in kind:
        return 2048, 1          # single TC; 6 MiB of double-buffered blocks
    if "v5p" in kind:
        return 4096, 2          # megacore part
    if "v5" in kind:
        return 2048, 1          # v5e: stay well inside 16 MiB scoped default
    if "v4" in kind:
        return 2048, 2          # megacore part
    return 1024, 1


@functools.partial(
    jax.jit, static_argnames=("tile_rows", "num_slices", "approx_reciprocal"))
def nll_loss(mu, sigma, y, *, tile_rows=None, num_slices=None,
             approx_reciprocal=True):
    """Scalar -Normal(mu, sigma).log_prob(y).mean() via a Pallas TPU kernel.

    Accepts arbitrary (matching) shapes and f32/bf16/fp16 inputs.
    """
    assert mu.shape == sigma.shape == y.shape
    total = int(mu.size)
    assert total > 0

    if tile_rows is None or num_slices is None:
        d_tile, d_slices = _device_defaults()
        tile_rows = d_tile if tile_rows is None else tile_rows
        num_slices = d_slices if num_slices is None else num_slices

    # ---- lane-dense layout: (rows, 128) view of the flattened data ---------
    rows = pl.cdiv(total, _LANES)

    # Row tile: multiple of 8 sublanes (16 for packed 16-bit inputs), capped
    # by `tile_rows`, shrunk for tiny inputs so they are not over-tiled.
    any16 = any(jnp.dtype(a.dtype).itemsize == 2 for a in (mu, sigma, y))
    sub = 2 * _SUBLANES if any16 else _SUBLANES
    tr = min(tile_rows, pl.cdiv(rows, sub) * sub)
    tr = max(sub, (tr // sub) * sub)

    # Grid rounding is decoupled from data padding: tiles cover `rows` rows,
    # the last tile may be partial, and any slice-split overflow is clamped.
    total_tiles = pl.cdiv(rows, tr)
    num_slices = max(1, min(num_slices, total_tiles))
    tiles_per_slice = pl.cdiv(total_tiles, num_slices)
    need_mask = (rows % tr != 0) or (num_slices * tiles_per_slice != total_tiles)

    padded_total = rows * _LANES

    def _lane_view(x, pad_value):
        x = x.reshape(-1)  # contiguous flatten: bitcast, no HBM copy
        if padded_total != total:
            # Sub-128-element tail pad, only for non-lane-aligned flat sizes.
            # (Unavoidable without manual DMA: the last 128-lane row must
            # physically exist in HBM for the block DMA.)
            pad = jnp.full((padded_total - total,), pad_value, dtype=x.dtype)
            x = jnp.concatenate([x, pad])
        return x.reshape(rows, _LANES)

    # Neutral pad values (mu=0, sigma=1, y=0) contribute exactly 0 to the
    # accumulated sum (0.5*log(2*pi) is added once below), so the padded
    # lanes of the last valid row need no in-kernel mask.
    mu_p = _lane_view(mu, 0)
    sigma_p = _lane_view(sigma, 1)
    y_p = _lane_view(y, 0)

    def in_index_map(s, i):
        t = s * tiles_per_slice + i
        # Clamp overflow grid points (when total_tiles % num_slices != 0);
        # their contribution is zeroed by the in-kernel row mask.
        return (jnp.minimum(t, total_tiles - 1), 0)

    in_spec = pl.BlockSpec((tr, _LANES), in_index_map)

    kernel = functools.partial(
        _nll_kernel,
        tiles_per_slice=tiles_per_slice,
        tile_rows=tr,
        valid_rows=rows,
        need_mask=need_mask,
        approx=bool(approx_reciprocal),
    )

    partials = pl.pallas_call(
        kernel,
        out_shape=jax.ShapeDtypeStruct((num_slices, _SUBLANES, _LANES),
                                       jnp.float32),
        grid_spec=pltpu.PrefetchScalarGridSpec(
            num_scalar_prefetch=0,
            grid=(num_slices, tiles_per_slice),
            in_specs=[in_spec, in_spec, in_spec],
            out_specs=pl.BlockSpec((1, _SUBLANES, _LANES),
                                   lambda s, i: (s, 0, 0)),
        ),
        compiler_params=pltpu.CompilerParams(
            dimension_semantics=("parallel", "arbitrary")),
    )(mu_p, sigma_p, y_p)

    # Final cross-slice/sublane/lane reduction, mean, and hoisted constant.
    return jnp.sum(partials) / jnp.float32(total) + jnp.float32(_HALF_LOG_2PI)


if __name__ == "__main__":
    key = jax.random.PRNGKey(0)
    k_mu, k_sig, k_y = jax.random.split(key, 3)

    def ref_loss(mu, sigma, y):
        mu, sigma, y = (a.astype(jnp.float32) for a in (mu, sigma, y))
        return -jnp.mean(jax.scipy.stats.norm.logpdf(y, loc=mu, scale=sigma))

    # Case 1: small regression-style problem with feat NOT a multiple of 128,
    # exercising the sub-128 neutral tail pad, the ragged-last-tile mask, the
    # multi-step resident accumulator (tile_rows=8) and the 2-slice split
    # (including a clamped+masked duplicate tile).
    rows, feat = 64, 33
    mu = jax.random.normal(k_mu, (rows, feat), dtype=jnp.float32)
    sigma = jax.nn.softplus(
        jax.random.normal(k_sig, (rows, feat), dtype=jnp.float32)) + 1e-3
    y = jax.random.normal(k_y, (rows, feat), dtype=jnp.float32)

    ref = ref_loss(mu, sigma, y)
    loss = jax.block_until_ready(
        nll_loss(mu, sigma, y, tile_rows=8, num_slices=2,
                 approx_reciprocal=False))
    assert jnp.allclose(loss, ref, rtol=1e-5, atol=1e-5), (loss, ref)

    # Same problem through the default approx-reciprocal path (low-order bits
    # differ -> slightly looser tolerance).
    loss_a = jax.block_until_ready(
        nll_loss(mu, sigma, y, tile_rows=8, num_slices=2))
    assert jnp.allclose(loss_a, ref, rtol=2e-3, atol=2e-3), (loss_a, ref)

    # Case 2: lane-aligned shape with device-default tiling (zero-copy path:
    # the (rows, 128) view is a pure bitcast, no padding, no masking).
    rows2, feat2 = 64, 128
    mu2 = jax.random.normal(k_mu, (rows2, feat2), dtype=jnp.float32)
    sigma2 = jax.nn.softplus(
        jax.random.normal(k_sig, (rows2, feat2), dtype=jnp.float32)) + 1e-3
    y2 = jax.random.normal(k_y, (rows2, feat2), dtype=jnp.float32)
    ref2 = ref_loss(mu2, sigma2, y2)
    loss2 = jax.block_until_ready(
        nll_loss(mu2, sigma2, y2, approx_reciprocal=False))
    assert jnp.allclose(loss2, ref2, rtol=1e-5, atol=1e-5), (loss2, ref2)

    # Case 3: bf16 inputs (halved HBM read bytes; kernel upcasts to f32,
    # tile rows rounded to packed (16,128) vregs).
    mu3, sigma3, y3 = (a.astype(jnp.bfloat16) for a in (mu2, sigma2, y2))
    ref3 = ref_loss(mu3, sigma3, y3)
    loss3 = jax.block_until_ready(
        nll_loss(mu3, sigma3, y3, approx_reciprocal=False))
    assert jnp.allclose(loss3, ref3, rtol=1e-5, atol=1e-5), (loss3, ref3)

    print("KERNEL_OK")
</pallas_src>

<mosaic_0001>
module attributes {stable_mosaic.version = 11 : i64} {
  func.func @_nll_kernel(%arg0: i32, %arg1: i32, %arg2: memref<8x128xf32, #tpu.memory_space<vmem>>, %arg3: memref<8x128xf32, #tpu.memory_space<vmem>>, %arg4: memref<8x128xf32, #tpu.memory_space<vmem>>, %arg5: memref<1x8x128xf32, #tpu.memory_space<vmem>>) attributes {dimension_semantics = [#tpu.dimension_semantics<parallel>, #tpu.dimension_semantics<arbitrary>], iteration_bounds = array<i64: 2, 2>, scalar_prefetch = 0 : i64, scratch_operands = 0 : i64, tpu.core_type = #tpu.core_type<tc>, window_params = [{transform_indices = @transform_0, window_bounds = array<i64: 8, 128>}, {transform_indices = @transform_1, window_bounds = array<i64: 8, 128>}, {transform_indices = @transform_2, window_bounds = array<i64: 8, 128>}, {transform_indices = @transform_3, window_bounds = array<i64: 1, 8, 128>}]} {
    %c0_i32 = arith.constant 0 : i32
    %0 = arith.cmpi eq, %arg1, %c0_i32 : i32
    %1 = arith.extui %0 : i1 to i32
    %c0_i32_0 = arith.constant 0 : i32
    %2 = arith.cmpi ne, %1, %c0_i32_0 : i32
    scf.if %2 {
      %cst_15 = arith.constant 0.000000e+00 : f32
      %33 = vector.broadcast %cst_15 : f32 to vector<1x8x128xf32>
      %c0_16 = arith.constant 0 : index
      %c0_17 = arith.constant 0 : index
      %c0_18 = arith.constant 0 : index
      %34 = vector.load %arg5[%c0_16, %c0_17, %c0_18] : memref<1x8x128xf32, #tpu.memory_space<vmem>>, vector<1x8x128xf32>
      tpu.vector_store %arg5[%c0_16, %c0_17, %c0_18], %33 {strides = array<i32>} : memref<1x8x128xf32, #tpu.memory_space<vmem>>, vector<1x8x128xf32>,
    } else {
    }
    %c0 = arith.constant 0 : index
    %c0_1 = arith.constant 0 : index
    %3 = vector.load %arg2[%c0, %c0_1] : memref<8x128xf32, #tpu.memory_space<vmem>>, vector<8x128xf32>
    %c0_2 = arith.constant 0 : index
    %c0_3 = arith.constant 0 : index
    %4 = vector.load %arg3[%c0_2, %c0_3] : memref<8x128xf32, #tpu.memory_space<vmem>>, vector<8x128xf32>
    %c0_4 = arith.constant 0 : index
    %c0_5 = arith.constant 0 : index
    %5 = vector.load %arg4[%c0_4, %c0_5] : memref<8x128xf32, #tpu.memory_space<vmem>>, vector<8x128xf32>
    %cst = arith.constant 9.99999996E-13 : f32
    %6 = vector.broadcast %cst : f32 to vector<8x128xf32>
    %7 = arith.maximumf %4, %6 : vector<8x128xf32>
    %8 = arith.subf %5, %3 : vector<8x128xf32>
    %9 = arith.divf %8, %7 : vector<8x128xf32>
    %10 = math.log %7 : vector<8x128xf32>
    %11 = arith.mulf %9, %9 : vector<8x128xf32>
    %cst_6 = arith.constant 5.000000e-01 : f32
    %12 = vector.broadcast %cst_6 : f32 to vector<8x128xf32>
    %13 = arith.mulf %12, %11 : vector<8x128xf32>
    %14 = arith.addf %10, %13 : vector<8x128xf32>
    %c2_i32 = arith.constant 2 : i32
    %15 = arith.muli %arg0, %c2_i32 : i32
    %16 = arith.addi %15, %arg1 : i32
    %c8_i32 = arith.constant 8 : i32
    %17 = arith.muli %16, %c8_i32 : i32
    %18 = tpu.iota {dimensions = array<i32: 0>} : vector<8x128xi32>
    %19 = vector.broadcast %17 : i32 to vector<8x128xi32>
    %20 = arith.addi %19, %18 : vector<8x128xi32>
    %c17_i32 = arith.constant 17 : i32
    %21 = vector.broadcast %c17_i32 : i32 to vector<8x128xi32>
    %22 = arith.cmpi slt, %20, %21 : vector<8x128xi32>
    %cst_7 = arith.constant 0.000000e+00 : f32
    %23 = vector.broadcast %cst_7 : f32 to vector<8x128xf32>
    %24 = arith.select %22, %14, %23 : vector<8x128xi1>, vector<8x128xf32>
    %25 = vector.shape_cast %24 : vector<8x128xf32> to vector<1x8x128xf32>
    %cst_8 = arith.constant dense<0.000000e+00> : vector<8x128xf32>
    %26 = vector.multi_reduction <add>, %25, %cst_8 [0] : vector<1x8x128xf32> to vector<8x128xf32>
    %c0_9 = arith.constant 0 : index
    %c0_10 = arith.constant 0 : index
    %c0_11 = arith.constant 0 : index
    %27 = vector.load %arg5[%c0_9, %c0_10, %c0_11] : memref<1x8x128xf32, #tpu.memory_space<vmem>>, vector<1x8x128xf32>
    %28 = vector.shape_cast %27 : vector<1x8x128xf32> to vector<8x128xf32>
    %29 = arith.addf %28, %26 : vector<8x128xf32>
    %c0_12 = arith.constant 0 : index
    %c0_13 = arith.constant 0 : index
    %c0_14 = arith.constant 0 : index
    %30 = vector.load %arg5[%c0_12, %c0_13, %c0_14] : memref<1x8x128xf32, #tpu.memory_space<vmem>>, vector<1x8x128xf32>
    %31 = vector.shape_cast %30 : vector<1x8x128xf32> to vector<8x128xf32>
    %32 = vector.shape_cast %29 : vector<8x128xf32> to vector<1x8x128xf32>
    tpu.vector_store %arg5[%c0_12, %c0_13, %c0_14], %32 {strides = array<i32>} : memref<1x8x128xf32, #tpu.memory_space<vmem>>, vector<1x8x128xf32>,
    return
  }
  func.func @transform_0(%arg0: i32, %arg1: i32) -> (i32, i32) {
    %c2_i32 = arith.constant 2 : i32
    %0 = arith.muli %arg0, %c2_i32 : i32
    %1 = arith.addi %0, %arg1 : i32
    %c2_i32_0 = arith.constant 2 : i32
    %2 = arith.minsi %1, %c2_i32_0 : i32
    %c0_i32 = arith.constant 0 : i32
    %c0_i32_1 = arith.constant 0 : i32
    return %2, %c0_i32 : i32, i32
  }
  func.func @transform_1(%arg0: i32, %arg1: i32) -> (i32, i32) {
    %c2_i32 = arith.constant 2 : i32
    %0 = arith.muli %arg0, %c2_i32 : i32
    %1 = arith.addi %0, %arg1 : i32
    %c2_i32_0 = arith.constant 2 : i32
    %2 = arith.minsi %1, %c2_i32_0 : i32
    %c0_i32 = arith.constant 0 : i32
    %c0_i32_1 = arith.constant 0 : i32
    return %2, %c0_i32 : i32, i32
  }
  func.func @transform_2(%arg0: i32, %arg1: i32) -> (i32, i32) {
    %c2_i32 = arith.constant 2 : i32
    %0 = arith.muli %arg0, %c2_i32 : i32
    %1 = arith.addi %0, %arg1 : i32
    %c2_i32_0 = arith.constant 2 : i32
    %2 = arith.minsi %1, %c2_i32_0 : i32
    %c0_i32 = arith.constant 0 : i32
    %c0_i32_1 = arith.constant 0 : i32
    return %2, %c0_i32 : i32, i32
  }
  func.func @transform_3(%arg0: i32, %arg1: i32) -> (i32, i32, i32) {
    %c0_i32 = arith.constant 0 : i32
    %c0_i32_0 = arith.constant 0 : i32
    %c0_i32_1 = arith.constant 0 : i32
    return %arg0, %c0_i32, %c0_i32_0 : i32, i32, i32
  }
}

</mosaic_0001>

<llo_original>
// kernel: nll_loss.1
$region0: #{nll_loss.1}
  #allocation0 [shape = 'u32[]', space=smem, size = 0x4, offset = 0x4, fixed_abs, tag = 'smem constant byte address 0x4 - core index']
  #allocation1 [shape = 'u32[144,128]{1,0:T(1,128)}', space=vmem, size = 0x12000, scoped, tag = 'internal scratch']
  %s0 = inlined_call_operand.vmem [shape: f32[17,128], index: 0, kind: input, shape index: {}]
  %s1 = inlined_call_operand.vmem [shape: f32[17,128], index: 1, kind: input, shape index: {}]
  %s2 = inlined_call_operand.vmem [shape: f32[17,128], index: 2, kind: input, shape index: {}]
  %s3 = inlined_call_operand.vmem [shape: f32[2,8,128], index: 3, kind: output, shape index: {}]
  %s4 = sld [smem:[#allocation0]]
  $region49: #{nll_loss.1} parent=0
    _
  %s6 = ssub.s32 1, %s4
  %s7 = scalar_select 0, %s6, %s4
  loop: start=0, step=1, limit=6
  $region2: #{nll_loss.1} parent=0 // loop_pre_header
    _
  $region3: #{nll_loss.1} parent=0 // loop_header
    %s9 = sphi 0, %s13
    %p10 = scmp.ge.s32.totalorder %s9, 6
    %s16 = sphi 0, %s28
    %s17 = sphi 0, %s24
    %s18 = sphi 0, %s16
    %s19 = sphi 0, %s17
    %s20 = sphi 0, %s18
    %s21 = sphi 0, %s19
    %s39 = sphi 0, %s41
    %s42 = sphi 0, %s39
    %s43 = sphi 0, %s42
    %s59 = sphi 0, %s43
    %s73 = sphi 0, %s75
    %s76 = sphi 0, %s73
    %s77 = sphi 0, %s76
    %s93 = sphi 0, %s77
    %s107 = sphi 0, %s109
    %s110 = sphi 0, %s107
    %s111 = sphi 0, %s110
    %s127 = sphi 0, %s111
    %s133 = sphi 0, %s135
    %s136 = sphi 0, %s133
    %s137 = sphi 0, %s136
    %s153 = sphi 0, %s137
  $region4: #{nll_loss.1} parent=0 // loop_header_branch
    %12 = sbr.rel (%p10) target = $region8
  $region5: #{nll_loss.1} parent=0 // loop_body
    %s14 = ssub.s32 %s9, 1
    %s15 = ssub.s32 %s9, 2
    %s22 = sadd.s32 1, %s17
    %p23 = scmp.ge.s32.totalorder %s22, 2
    %s24 = scalar_select %p23, 0, %s22
    %s25 = sadd.s32 1, %s16
    %s26 = scalar_select %p23, %s25, %s16
    %p27 = scmp.ge.s32.totalorder %s26, 2
    %s28 = scalar_select %p27, 0, %s26
    %s29 = smul.u32 %s16, 2
    %s30 = sadd.s32 %s29, %s17
    %p31 = scmp.lt.s32.totalorder %s30, 2
    %s32 = scalar_select %p31, %s30, 2
    %s33 = smul.u32 %s28, 2
    %s34 = sadd.s32 %s33, %s24
    %p35 = scmp.lt.s32.totalorder %s34, 2
    %s36 = scalar_select %p35, %s34, 2
    %s37 = ssub.s32 %s32, %s36
    %p38 = scmp.eq.s32.totalorder %s37, 0
    %s40 = sadd.s32 %s39, 1
    %s41 = scalar_select %p38, %s39, %s40
    %p44 = pneg %p38
    %p45 = scmp.eq.s32.totalorder %s9, 3
    %p46 = por %p44, %p45
    %p47 = scmp.ne.s32.totalorder %s39, %s42
    %p48 = scmp.eq.s32.totalorder %s9, 0
    %p49 = por %p47, %p48
    %p50 = scmp.ne.s32.totalorder %s39, %s42
    %p51 = scmp.eq.s32.totalorder %s14, 3
    %p52 = por %p50, %p51
    %p53 = scmp.ne.s32.totalorder %s42, %s43
    %p54 = scmp.eq.s32.totalorder %s14, 0
    %p55 = por %p53, %p54
    %p56 = scmp.ne.s32.totalorder %s42, %s43
    %p57 = scmp.eq.s32.totalorder %s15, 3
    %p58 = por %p56, %p57
    %p60 = scmp.ne.s32.totalorder %s43, %s59
    %p61 = scmp.eq.s32.totalorder %s15, 0
    %p62 = por %p60, %p61
    %s63 = smul.u32 %s16, 2
    %s64 = sadd.s32 %s63, %s17
    %p65 = scmp.lt.s32.totalorder %s64, 2
    %s66 = scalar_select %p65, %s64, 2
    %s67 = smul.u32 %s28, 2
    %s68 = sadd.s32 %s67, %s24
    %p69 = scmp.lt.s32.totalorder %s68, 2
    %s70 = scalar_select %p69, %s68, 2
    %s71 = ssub.s32 %s66, %s70
    %p72 = scmp.eq.s32.totalorder %s71, 0
    %s74 = sadd.s32 %s73, 1
    %s75 = scalar_select %p72, %s73, %s74
    %p78 = pneg %p72
    %p79 = scmp.eq.s32.totalorder %s9, 3
    %p80 = por %p78, %p79
    %p81 = scmp.ne.s32.totalorder %s73, %s76
    %p82 = scmp.eq.s32.totalorder %s9, 0
    %p83 = por %p81, %p82
    %p84 = scmp.ne.s32.totalorder %s73, %s76
    %p85 = scmp.eq.s32.totalorder %s14, 3
    %p86 = por %p84, %p85
    %p87 = scmp.ne.s32.totalorder %s76, %s77
    %p88 = scmp.eq.s32.totalorder %s14, 0
    %p89 = por %p87, %p88
    %p90 = scmp.ne.s32.totalorder %s76, %s77
    %p91 = scmp.eq.s32.totalorder %s15, 3
    %p92 = por %p90, %p91
    %p94 = scmp.ne.s32.totalorder %s77, %s93
    %p95 = scmp.eq.s32.totalorder %s15, 0
    %p96 = por %p94, %p95
    %s97 = smul.u32 %s16, 2
    %s98 = sadd.s32 %s97, %s17
    %p99 = scmp.lt.s32.totalorder %s98, 2
    %s100 = scalar_select %p99, %s98, 2
    %s101 = smul.u32 %s28, 2
    %s102 = sadd.s32 %s101, %s24
    %p103 = scmp.lt.s32.totalorder %s102, 2
    %s104 = scalar_select %p103, %s102, 2
    %s105 = ssub.s32 %s100, %s104
    %p106 = scmp.eq.s32.totalorder %s105, 0
    %s108 = sadd.s32 %s107, 1
    %s109 = scalar_select %p106, %s107, %s108
    %p112 = pneg %p106
    %p113 = scmp.eq.s32.totalorder %s9, 3
    %p114 = por %p112, %p113
    %p115 = scmp.ne.s32.totalorder %s107, %s110
    %p116 = scmp.eq.s32.totalorder %s9, 0
    %p117 = por %p115, %p116
    %p118 = scmp.ne.s32.totalorder %s107, %s110
    %p119 = scmp.eq.s32.totalorder %s14, 3
    %p120 = por %p118, %p119
    %p121 = scmp.ne.s32.totalorder %s110, %s111
    %p122 = scmp.eq.s32.totalorder %s14, 0
    %p123 = por %p121, %p122
    %p124 = scmp.ne.s32.totalorder %s110, %s111
    %p125 = scmp.eq.s32.totalorder %s15, 3
    %p126 = por %p124, %p125
    %p128 = scmp.ne.s32.totalorder %s111, %s127
    %p129 = scmp.eq.s32.totalorder %s15, 0
    %p130 = por %p128, %p129
    %s131 = ssub.s32 %s16, %s28
    %p132 = scmp.eq.s32.totalorder %s131, 0
    %s134 = sadd.s32 %s133, 1
    %s135 = scalar_select %p132, %s133, %s134
    %p138 = pneg %p132
    %p139 = scmp.eq.s32.totalorder %s9, 3
    %p140 = por %p138, %p139
    %p141 = scmp.ne.s32.totalorder %s133, %s136
    %p142 = scmp.eq.s32.totalorder %s9, 0
    %p143 = por %p141, %p142
    %p144 = scmp.ne.s32.totalorder %s133, %s136
    %p145 = scmp.eq.s32.totalorder %s14, 3
    %p146 = por %p144, %p145
    %p147 = scmp.ne.s32.totalorder %s136, %s137
    %p148 = scmp.eq.s32.totalorder %s14, 0
    %p149 = por %p147, %p148
    %p150 = scmp.ne.s32.totalorder %s136, %s137
    %p151 = scmp.eq.s32.totalorder %s15, 3
    %p152 = por %p150, %p151
    %p154 = scmp.ne.s32.totalorder %s137, %s153
    %p155 = scmp.eq.s32.totalorder %s15, 0
    %p156 = por %p154, %p155
    %p157 = scmp.le.s32.totalorder 1, %s9
    %p158 = scmp.lt.s32.totalorder %s9, 5
    %p159 = pnand %p157, %p158
    %p160 = pneg %p159
    // Predicated region
    $region9: #{nll_loss.1} parent=5 // pred_check
      _
    $region10: #{nll_loss.1} parent=5 // pred_check_branch
      %162 = sbr.rel (%p159) target = $region12
    $region11: #{nll_loss.1} parent=5 // pred_region
      %s163 = ssub.s32 %s9, 1
    $region12: #{nll_loss.1} parent=5 // pred_fallthru
      _
    %p164 = scmp.lt.s32.totalorder %s9, 4
    // Predicated region
    $region13: #{nll_loss.1} parent=5 // pred_check
      %p165 = pneg %p164
    $region14: #{nll_loss.1} parent=5 // pred_check_branch
      %167 = sbr.rel (%p165) target = $region16
    $region15: #{nll_loss.1} parent=5 // pred_region
      // Predicated region
      $region17: #{nll_loss.1} parent=15 // pred_check
        %p168 = pneg %p49
      $region18: #{nll_loss.1} parent=15 // pred_check_branch
        %170 = sbr.rel (%p168) target = $region20
      $region19: #{nll_loss.1} parent=15 // pred_region
        %s171 = smul.u32 %s16, 2
        %s172 = sadd.s32 %s171, %s17
        %p173 = scmp.lt.s32.totalorder %s172, 2
        %s174 = scalar_select %p173, %s172, 2
        %p175 = scmp.lt.s32.totalorder %s174, 2
        %s176 = scalar_select %p175, %s174, 2
        %s177 = smul.addr %s176, 8
        %s178 = scalar_lea.vmem %s0, %s177
        %s179 = smul.u32 %s16, 2
        %s180 = sadd.s32 %s179, %s17
        %p181 = scmp.lt.s32.totalorder %s180, 2
        %s182 = scalar_select %p181, %s180, 2
      $region20: #{nll_loss.1} parent=15 // pred_fallthru
        _
      // Predicated region
      $region21: #{nll_loss.1} parent=15 // pred_check
        %p183 = pneg %p83
      $region22: #{nll_loss.1} parent=15 // pred_check_branch
        %185 = sbr.rel (%p183) target = $region24
      $region23: #{nll_loss.1} parent=15 // pred_region
        %s186 = smul.u32 %s16, 2
        %s187 = sadd.s32 %s186, %s17
        %p188 = scmp.lt.s32.totalorder %s187, 2
        %s189 = scalar_select %p188, %s187, 2
        %p190 = scmp.lt.s32.totalorder %s189, 2
        %s191 = scalar_select %p190, %s189, 2
        %s192 = smul.addr %s191, 8
        %s193 = scalar_lea.vmem %s1, %s192
        %s194 = smul.u32 %s16, 2
        %s195 = sadd.s32 %s194, %s17
        %p196 = scmp.lt.s32.totalorder %s195, 2
        %s197 = scalar_select %p196, %s195, 2
      $region24: #{nll_loss.1} parent=15 // pred_fallthru
        _
      // Predicated region
      $region25: #{nll_loss.1} parent=15 // pred_check
        %p198 = pneg %p117
      $region26: #{nll_loss.1} parent=15 // pred_check_branch
        %200 = sbr.rel (%p198) target = $region28
      $region27: #{nll_loss.1} parent=15 // pred_region
        %s201 = smul.u32 %s16, 2
        %s202 = sadd.s32 %s201, %s17
        %p203 = scmp.lt.s32.totalorder %s202, 2
        %s204 = scalar_select %p203, %s202, 2
        %p205 = scmp.lt.s32.totalorder %s204, 2
        %s206 = scalar_select %p205, %s204, 2
        %s207 = smul.addr %s206, 8
        %s208 = scalar_lea.vmem %s2, %s207
        %s209 = smul.u32 %s16, 2
        %s210 = sadd.s32 %s209, %s17
        %p211 = scmp.lt.s32.totalorder %s210, 2
        %s212 = scalar_select %p211, %s210, 2
      $region28: #{nll_loss.1} parent=15 // pred_fallthru
        _
    $region16: #{nll_loss.1} parent=5 // pred_fallthru
      _
    %p213 = scmp.le.s32.totalorder 1, %s9
    %p214 = scmp.lt.s32.totalorder %s9, 5
    %p215 = pnand %p213, %p214
    %p216 = pneg %p215
    // Predicated region
    $region29: #{nll_loss.1} parent=5 // pred_check
      _
    $region30: #{nll_loss.1} parent=5 // pred_check_branch
      %218 = sbr.rel (%p215) target = $region32
    $region31: #{nll_loss.1} parent=5 // pred_region
      %s219 = ssub.s32 %s9, 1
      %s220 = smul.u32 %s18, 2
      %s221 = sadd.s32 %s220, %s19
      %p222 = scmp.lt.s32.totalorder %s221, 2
      %s223 = scalar_select %p222, %s221, 2
      %p224 = scmp.lt.s32.totalorder %s223, 2
      %s225 = scalar_select %p224, %s223, 2
      %s226 = smul.addr %s225, 8
      %s227 = scalar_lea.vmem %s0, %s226
      %p228 = pneg %p55
      %p229 = pneg %p52
      %s230 = smul.u32 %s18, 2
      %s231 = sadd.s32 %s230, %s19
      %p232 = scmp.lt.s32.totalorder %s231, 2
      %s233 = scalar_select %p232, %s231, 2
      %p234 = scmp.lt.s32.totalorder %s233, 2
      %s235 = scalar_select %p234, %s233, 2
      %s236 = smul.addr %s235, 8
      %s237 = scalar_lea.vmem %s1, %s236
      %p238 = pneg %p89
      %p239 = pneg %p86
      %s240 = smul.u32 %s18, 2
      %s241 = sadd.s32 %s240, %s19
      %p242 = scmp.lt.s32.totalorder %s241, 2
      %s243 = scalar_select %p242, %s241, 2
      %p244 = scmp.lt.s32.totalorder %s243, 2
      %s245 = scalar_select %p244, %s243, 2
      %s246 = smul.addr %s245, 8
      %s247 = scalar_lea.vmem %s2, %s246
      %p248 = pneg %p123
      %p249 = pneg %p120
      %p250 = pneg %p149
      %p251 = pneg %p146
      %p252 = scmp.lt.s32.totalorder %s18, 1
      %s253 = scalar_select %p252, %s18, 1
      %s254 = smul.addr %s253, 8
      %s255 = scalar_lea.vmem %s3, %s254
      %s256 = smul.u32 %s18, 2
      %s257 = sadd.s32 %s256, %s19
      %p258 = scmp.lt.s32.totalorder %s257, 2
      %s259 = scalar_select %p258, %s257, 2
      %p260 = scmp.lt.s32.totalorder %s259, 2
      %s261 = scalar_select %p260, %s259, 2
      %s262 = smul.addr %s261, 8
      %s263 = scalar_lea.vmem %s0, %s262
      %s264 = smul.u32 %s18, 2
      %s265 = sadd.s32 %s264, %s19
      %p266 = scmp.lt.s32.totalorder %s265, 2
      %s267 = scalar_select %p266, %s265, 2
      %s268 = smul.u32 %s18, 2
      %s269 = sadd.s32 %s268, %s19
      %p270 = scmp.lt.s32.totalorder %s269, 2
      %s271 = scalar_select %p270, %s269, 2
      %p272 = scmp.lt.s32.totalorder %s271, 2
      %s273 = scalar_select %p272, %s271, 2
      %s274 = smul.addr %s273, 8
      %s275 = scalar_lea.vmem %s1, %s274
      %s276 = smul.u32 %s18, 2
      %s277 = sadd.s32 %s276, %s19
      %p278 = scmp.lt.s32.totalorder %s277, 2
      %s279 = scalar_select %p278, %s277, 2
      %s280 = smul.u32 %s18, 2
      %s281 = sadd.s32 %s280, %s19
      %p282 = scmp.lt.s32.totalorder %s281, 2
      %s283 = scalar_select %p282, %s281, 2
      %p284 = scmp.lt.s32.totalorder %s283, 2
      %s285 = scalar_select %p284, %s283, 2
      %s286 = smul.addr %s285, 8
      %s287 = scalar_lea.vmem %s2, %s286
      %s288 = smul.u32 %s18, 2
      %s289 = sadd.s32 %s288, %s19
      %p290 = scmp.lt.s32.totalorder %s289, 2
      %s291 = scalar_select %p290, %s289, 2
      %p292 = scmp.lt.s32.totalorder %s18, 1
      %s293 = scalar_select %p292, %s18, 1
      %s294 = smul.addr %s293, 8
      %s295 = scalar_lea.vmem %s3, %s294
      %p296 = scmp.eq.s32.totalorder %s19, 0
      // Predicated region
      $region33: #{nll_loss.1} parent=31 // pred_check
        %p297 = pneg %p296
      $region34: #{nll_loss.1} parent=31 // pred_check_branch
        %299 = sbr.rel (%p297) target = $region36
      $region35: #{nll_loss.1} parent=31 // pred_region
        %300 = vst [vmem:[%s295] sm:$0xff] 0.0
      $region36: #{nll_loss.1} parent=31 // pred_fallthru
        _
      %v301 = vld [vmem:[%s263] sm:$0xff]
      %v302 = vld [vmem:[%s275] sm:$0xff]
      %v303 = vld [vmem:[%s287] sm:$0xff]
      %v304 = vmax.f32 %v302, 1e-12
      %v305 = vsub.f32 %v303, %v301
      %v306 = vrcp.pop %v304
      %v307 = vmul.f32 %v305, %v306
      %v308 = vlog2.pop %v304
      %v309 = vmul.f32 %v308, 0.6931472
      %v310 = vmul.f32 %v307, %v307
      %v311 = vmul.f32 %v310, 0.5
      %v312 = vadd.f32 %v309, %v311
      %s313 = smul.u32 %s18, 2
      %s314 = sadd.s32 %s313, %s19
      %s315 = smul.u32 %s314, 8
      %v316 = vlaneseq
      %v317 = vshrl.u32 %v316, 7
      %v318 = vstv %s315
      %v319 = vadd.s32 %v318, %v317
      %vm320 = vcmp.lt.s32.totalorder %v319, 17
      %v321 = vsel %vm320, %v312, 0.0
      %v322 = vadd.f32 %v321, 0.0
      %v323 = vld [vmem:[%s295] sm:$0xff]
      %v324 = vadd.f32 %v323, %v322
      %325 = vst [vmem:[%s295] sm:$0xff] %v324
      %p326 = scmp.lt.s32.totalorder %s18, 1
      %s327 = scalar_select %p326, %s18, 1
      %s328 = smul.addr %s327, 8
      %s329 = scalar_lea.vmem %s3, %s328
      // Predicated region
      $region37: #{nll_loss.1} parent=31 // pred_check
        %p330 = pneg %p146
      $region38: #{nll_loss.1} parent=31 // pred_check_branch
        %332 = sbr.rel (%p330) target = $region40
      $region39: #{nll_loss.1} parent=31 // pred_region
        _
      $region40: #{nll_loss.1} parent=31 // pred_fallthru
        _
    $region32: #{nll_loss.1} parent=5 // pred_fallthru
      _
    %p333 = scmp.le.s32.totalorder 2, %s9
    // Predicated region
    $region41: #{nll_loss.1} parent=5 // pred_check
      %p334 = pneg %p333
    $region42: #{nll_loss.1} parent=5 // pred_check_branch
      %336 = sbr.rel (%p334) target = $region44
    $region43: #{nll_loss.1} parent=5 // pred_region
      %s337 = ssub.s32 %s9, 2
      // Predicated region
      $region45: #{nll_loss.1} parent=43 // pred_check
        %p338 = pneg %p152
      $region46: #{nll_loss.1} parent=43 // pred_check_branch
        %340 = sbr.rel (%p338) target = $region48
      $region47: #{nll_loss.1} parent=43 // pred_region
        %p341 = scmp.lt.s32.totalorder %s20, 1
        %s342 = scalar_select %p341, %s20, 1
        %s343 = smul.addr %s342, 8
        %s344 = scalar_lea.vmem %s3, %s343
      $region48: #{nll_loss.1} parent=43 // pred_fallthru
        _
    $region44: #{nll_loss.1} parent=5 // pred_fallthru
      _
  $region6: #{nll_loss.1} parent=0 // loop_footer
    %s13 = sadd.s32 1, %s9
  $region7: #{nll_loss.1} parent=0 // loop_footer_branch
    %8 = sbr.rel target = $region3
  $region8: #{nll_loss.1} parent=0 // loop_exit
    _

</llo_original>
